<compile_context>
chip_gen: v7x
topology: tpu7x:2x2x1
jax: 0.10.0
libtpu: 0.0.40
codegen_flags: <defaults>
</compile_context>

<pallas_src>
import functools

import jax
import jax.numpy as jnp
from jax.experimental import pallas as pl
from jax.experimental.pallas import tpu as pltpu

EPS = 1e-5  # torch.nn.LayerNorm default eps

_MAX_TILE_ROWS = 512                   # big row tiles -> near HBM roofline
_VMEM_TILE_BUDGET = 24 * 1024 * 1024   # stay under the 32 MiB scoped default


# ---------------------------------------------------------------------------
# Small host-side helpers
# ---------------------------------------------------------------------------
def _round_up(n, m):
    return ((n + m - 1) // m) * m


def _pick_tile_rows(n_rows, hidden, n_bufs, resident_bytes=0):
    """Largest multiple-of-8 row tile keeping n_bufs double-buffered
    (rows, hidden) f32 tiles (plus any resident weights) under the budget."""
    budget = _VMEM_TILE_BUDGET - resident_bytes
    per_row = n_bufs * 2 * hidden * 4
    t = max(8, min(_MAX_TILE_ROWS, budget // per_row))
    t = (t // 8) * 8
    return min(t, _round_up(n_rows, 8))


def _pad_rows(x2d, rows_padded):
    r = x2d.shape[0]
    if rows_padded == r:
        return x2d
    return jnp.pad(x2d, ((0, rows_padded - r), (0, 0)))


def _pick_col_tile(n, preferred=256):
    # 256-wide tiles feed the 256x256 MXU on v6e/v7x; 128 is the v5e-optimal
    # fallback (and the fallback when 256 does not divide n).
    for t in (preferred, 128):
        if n % t == 0:
            return t
    return n


# ---------------------------------------------------------------------------
# In-kernel helpers
# ---------------------------------------------------------------------------
def _keep_mask(seed, shape, row_start, n_cols, keep_prob):
    """Inverted-dropout keep mask, already scaled by 1/keep_prob.

    Counter-based hash of the global element index, so the mask depends only
    on (seed, global_row, col): identical regardless of row tiling, grid
    order, or which TensorCore processes the tile.  Pure jnp ops (portable,
    no pltpu.prng_* which only lowers on real TPU)."""
    r = jax.lax.broadcasted_iota(jnp.int32, shape, 0) + row_start
    c = jax.lax.broadcasted_iota(jnp.int32, shape, 1)
    h = (r * n_cols + c).astype(jnp.uint32) ^ seed.astype(jnp.uint32)
    # murmur/pcg-style avalanche
    h = (h ^ (h >> 16)) * jnp.uint32(0x7FEB352D)
    h = (h ^ (h >> 15)) * jnp.uint32(0x846CA68B)
    h = h ^ (h >> 16)
    u = (h >> 8).astype(jnp.float32) * jnp.float32(1.0 / (1 << 24))
    return jnp.where(u < keep_prob, jnp.float32(1.0 / keep_prob),
                     jnp.float32(0.0))


def _layernorm_f32(x, gamma, beta):
    mean = jnp.mean(x, axis=-1, keepdims=True)
    var = jnp.mean((x - mean) ** 2, axis=-1, keepdims=True)
    return (x - mean) * jax.lax.rsqrt(var + EPS) * gamma + beta


# ---------------------------------------------------------------------------
# Kernels
# ---------------------------------------------------------------------------
def _layernorm_kernel(x_ref, g_ref, b_ref, o_ref):
    x = x_ref[...].astype(jnp.float32)
    o_ref[...] = _layernorm_f32(x, g_ref[...], b_ref[...]).astype(o_ref.dtype)


def _residual_dropout_kernel(seed_ref, x_ref, s_ref, o_ref, *,
                             keep_prob, tile_rows, hidden):
    # out = x + dropout(s)
    x = x_ref[...].astype(jnp.float32)
    s = s_ref[...].astype(jnp.float32)
    if keep_prob < 1.0:
        row_start = pl.program_id(0) * tile_rows
        s = s * _keep_mask(seed_ref[0], s.shape, row_start, hidden, keep_prob)
    o_ref[...] = (x + s).astype(o_ref.dtype)


def _add_dropout_layernorm_kernel(seed_ref, x_ref, s_ref, g_ref, b_ref, o_ref,
                                  *, keep_prob, tile_rows, hidden):
    # out = layernorm(x + dropout(s))
    x = x_ref[...].astype(jnp.float32)
    s = s_ref[...].astype(jnp.float32)
    if keep_prob < 1.0:
        row_start = pl.program_id(0) * tile_rows
        s = s * _keep_mask(seed_ref[0], s.shape, row_start, hidden, keep_prob)
    o_ref[...] = _layernorm_f32(x + s, g_ref[...],
                                b_ref[...]).astype(o_ref.dtype)


def _matmul_kernel(x_ref, w_ref, b_ref, o_ref, acc_ref):
    @pl.when(pl.program_id(2) == 0)
    def _():
        acc_ref[...] = jnp.zeros_like(acc_ref)

    acc_ref[...] += jnp.dot(x_ref[...], w_ref[...],
                            preferred_element_type=jnp.float32)

    @pl.when(pl.program_id(2) == pl.num_programs(2) - 1)
    def _():
        o_ref[...] = (acc_ref[...] + b_ref[...]).astype(o_ref.dtype)


def _fused_pre_ln_linear_kernel(seed_ref, x_ref, w_ref, wb_ref, g_ref, b_ref,
                                o_ref, *, keep_prob, tile_rows, hidden):
    # out = x + dropout(norm(x) @ W + wb)   -- one HBM read of x, one write.
    x = x_ref[...].astype(jnp.float32)
    normed = _layernorm_f32(x, g_ref[...], b_ref[...])
    s = jnp.dot(normed, w_ref[...].astype(jnp.float32),
                preferred_element_type=jnp.float32) + wb_ref[...]
    if keep_prob < 1.0:
        row_start = pl.program_id(0) * tile_rows
        s = s * _keep_mask(seed_ref[0], s.shape, row_start, hidden, keep_prob)
    o_ref[...] = (x + s).astype(o_ref.dtype)


def _fused_post_ln_linear_kernel(seed_ref, x_ref, w_ref, wb_ref, g_ref, b_ref,
                                 o_ref, *, keep_prob, tile_rows, hidden):
    # out = norm(x + dropout(x @ W + wb))
    x = x_ref[...].astype(jnp.float32)
    s = jnp.dot(x, w_ref[...].astype(jnp.float32),
                preferred_element_type=jnp.float32) + wb_ref[...]
    if keep_prob < 1.0:
        row_start = pl.program_id(0) * tile_rows
        s = s * _keep_mask(seed_ref[0], s.shape, row_start, hidden, keep_prob)
    o_ref[...] = _layernorm_f32(x + s, g_ref[...],
                                b_ref[...]).astype(o_ref.dtype)


# ---------------------------------------------------------------------------
# Wrappers (pallas_call plumbing) -- rows are padded to a tile multiple so no
# trailing rows are ever silently dropped; the pad is sliced off on return.
# ---------------------------------------------------------------------------
def layernorm(x2d, gamma, beta):
    R, H = x2d.shape
    tr = _pick_tile_rows(R, H, n_bufs=2)
    Rp = _round_up(R, tr)
    out = pl.pallas_call(
        _layernorm_kernel,
        out_shape=jax.ShapeDtypeStruct((Rp, H), x2d.dtype),
        grid=(Rp // tr,),
        in_specs=[pl.BlockSpec((tr, H), lambda i: (i, 0)),
                  pl.BlockSpec((1, H), lambda i: (0, 0)),
                  pl.BlockSpec((1, H), lambda i: (0, 0))],
        out_specs=pl.BlockSpec((tr, H), lambda i: (i, 0)),
        compiler_params=pltpu.CompilerParams(dimension_semantics=("parallel",)),
    )(_pad_rows(x2d, Rp), gamma, beta)
    return out[:R]


def residual_dropout(x2d, sub2d, seed, p):
    R, H = x2d.shape
    keep_prob = 1.0 - float(p)
    tr = _pick_tile_rows(R, H, n_bufs=3)
    Rp = _round_up(R, tr)
    kernel = functools.partial(_residual_dropout_kernel, keep_prob=keep_prob,
                               tile_rows=tr, hidden=H)
    out = pl.pallas_call(
        kernel,
        out_shape=jax.ShapeDtypeStruct((Rp, H), x2d.dtype),
        grid_spec=pltpu.PrefetchScalarGridSpec(
            num_scalar_prefetch=1,
            grid=(Rp // tr,),
            in_specs=[pl.BlockSpec((tr, H), lambda i, s: (i, 0)),
                      pl.BlockSpec((tr, H), lambda i, s: (i, 0))],
            out_specs=pl.BlockSpec((tr, H), lambda i, s: (i, 0))),
        compiler_params=pltpu.CompilerParams(dimension_semantics=("parallel",)),
    )(jnp.asarray([seed], jnp.int32), _pad_rows(x2d, Rp), _pad_rows(sub2d, Rp))
    return out[:R]


def add_dropout_layernorm(x2d, sub2d, gamma, beta, seed, p):
    R, H = x2d.shape
    keep_prob = 1.0 - float(p)
    tr = _pick_tile_rows(R, H, n_bufs=3)
    Rp = _round_up(R, tr)
    kernel = functools.partial(_add_dropout_layernorm_kernel,
                               keep_prob=keep_prob, tile_rows=tr, hidden=H)
    out = pl.pallas_call(
        kernel,
        out_shape=jax.ShapeDtypeStruct((Rp, H), x2d.dtype),
        grid_spec=pltpu.PrefetchScalarGridSpec(
            num_scalar_prefetch=1,
            grid=(Rp // tr,),
            in_specs=[pl.BlockSpec((tr, H), lambda i, s: (i, 0)),
                      pl.BlockSpec((tr, H), lambda i, s: (i, 0)),
                      pl.BlockSpec((1, H), lambda i, s: (0, 0)),
                      pl.BlockSpec((1, H), lambda i, s: (0, 0))],
            out_specs=pl.BlockSpec((tr, H), lambda i, s: (i, 0))),
        compiler_params=pltpu.CompilerParams(dimension_semantics=("parallel",)),
    )(jnp.asarray([seed], jnp.int32), _pad_rows(x2d, Rp), _pad_rows(sub2d, Rp),
      gamma, beta)
    return out[:R]


def linear(x2d, w, b):
    """Tiled, pipelined y = x @ w + b with f32 MXU accumulation."""
    R, K = x2d.shape
    Kw, N = w.shape
    assert K == Kw
    tn = _pick_col_tile(N)
    tk = _pick_col_tile(K)
    tm = min(256, _round_up(R, 8))
    Rp = _round_up(R, tm)
    out = pl.pallas_call(
        _matmul_kernel,
        out_shape=jax.ShapeDtypeStruct((Rp, N), x2d.dtype),
        grid_spec=pltpu.PrefetchScalarGridSpec(
            num_scalar_prefetch=0,
            grid=(Rp // tm, N // tn, K // tk),
            in_specs=[pl.BlockSpec((tm, tk), lambda i, j, k: (i, k)),
                      pl.BlockSpec((tk, tn), lambda i, j, k: (k, j)),
                      pl.BlockSpec((1, tn), lambda i, j, k: (0, j))],
            out_specs=pl.BlockSpec((tm, tn), lambda i, j, k: (i, j)),
            scratch_shapes=[pltpu.VMEM((tm, tn), jnp.float32)]),
        compiler_params=pltpu.CompilerParams(
            dimension_semantics=("parallel", "parallel", "arbitrary")),
    )(_pad_rows(x2d, Rp), w, jnp.reshape(b, (1, N)))
    return out[:R]


def _fused_ln_linear(kernel_fn, x2d, w, wb, gamma, beta, seed, p):
    """Single-kernel LN + matmul + dropout + residual (pre- or post-LN)."""
    R, H = x2d.shape
    assert w.shape == (H, H), "fused path requires a square (H, H) sublayer"
    keep_prob = 1.0 - float(p)
    # W stays resident in VMEM (constant block index); budget row tiles around it.
    tr = _pick_tile_rows(R, H, n_bufs=3, resident_bytes=H * H * 4)
    Rp = _round_up(R, tr)
    kernel = functools.partial(kernel_fn, keep_prob=keep_prob,
                               tile_rows=tr, hidden=H)
    out = pl.pallas_call(
        kernel,
        out_shape=jax.ShapeDtypeStruct((Rp, H), x2d.dtype),
        grid_spec=pltpu.PrefetchScalarGridSpec(
            num_scalar_prefetch=1,
            grid=(Rp // tr,),
            in_specs=[pl.BlockSpec((tr, H), lambda i, s: (i, 0)),   # x rows
                      pl.BlockSpec((H, H), lambda i, s: (0, 0)),    # W (resident)
                      pl.BlockSpec((1, H), lambda i, s: (0, 0)),    # linear bias
                      pl.BlockSpec((1, H), lambda i, s: (0, 0)),    # gamma
                      pl.BlockSpec((1, H), lambda i, s: (0, 0))],   # beta
            out_specs=pl.BlockSpec((tr, H), lambda i, s: (i, 0))),
        compiler_params=pltpu.CompilerParams(dimension_semantics=("parallel",)),
    )(jnp.asarray([seed], jnp.int32), _pad_rows(x2d, Rp), w,
      jnp.reshape(wb, (1, H)), gamma, beta)
    return out[:R]


# ---------------------------------------------------------------------------
# Module equivalents
# ---------------------------------------------------------------------------
class PallasLinear:
    """Linear layer backed by the tiled Pallas matmul.  Recognised by
    SublayerConnection so the whole sublayer connection fuses into one kernel."""

    def __init__(self, w, b):
        self.w = w
        self.b = jnp.reshape(b, (1, -1))
        self.in_features, self.out_features = w.shape

    def __call__(self, x2d):
        return linear(x2d, self.w, self.b)


class SublayerConnection:
    """JAX/Pallas equivalent of the PyTorch SublayerConnection module."""

    def __init__(self, size, dropout, pre_layer_normalization):
        self.size = size
        self.p = float(dropout)
        self.pre_layer_normalization = pre_layer_normalization
        # nn.LayerNorm default init
        self.gamma = jnp.ones((1, size), jnp.float32)
        self.beta = jnp.zeros((1, size), jnp.float32)

    def __call__(self, x, sublayer, *, seed=0, training=True):
        B, S, H = x.shape
        assert H == self.size
        x2 = x.reshape(B * S, H)
        p = self.p if training else 0.0   # nn.Dropout is identity in eval mode

        if (isinstance(sublayer, PallasLinear)
                and sublayer.in_features == H and sublayer.out_features == H):
            # Fully fused single-kernel path: no intermediate HBM round trips.
            kfn = (_fused_pre_ln_linear_kernel if self.pre_layer_normalization
                   else _fused_post_ln_linear_kernel)
            out = _fused_ln_linear(kfn, x2, sublayer.w, sublayer.b,
                                   self.gamma, self.beta, seed, p)
        elif self.pre_layer_normalization:
            # TODO(synk): arbitrary callables cannot be fused through; this
            # generic path still makes one extra activation round trip per stage.
            normed = layernorm(x2, self.gamma, self.beta)
            out = residual_dropout(x2, sublayer(normed), seed, p)
        else:
            out = add_dropout_layernorm(x2, sublayer(x2), self.gamma,
                                        self.beta, seed, p)
        return out.reshape(B, S, H)


# ---------------------------------------------------------------------------
if __name__ == "__main__":
    key = jax.random.PRNGKey(0)
    B, S, H = 2, 8, 128
    kx, kw = jax.random.split(key)

    x = jax.random.normal(kx, (B, S, H), jnp.float32)
    W = jax.random.normal(kw, (H, H), jnp.float32) * 0.02
    b = jnp.zeros((H,), jnp.float32)
    sub = PallasLinear(W, b)

    pre_ln = SublayerConnection(H, dropout=0.1, pre_layer_normalization=True)
    post_ln = SublayerConnection(H, dropout=0.1, pre_layer_normalization=False)

    # Fused single-kernel path (PallasLinear sublayer is recognised).
    y_pre = pre_ln(x, sub, seed=0)
    y_post = post_ln(x, sub, seed=1)

    # Generic (unfused) path through the standalone kernels, forced by hiding
    # the linear behind a plain callable.
    y_pre_ref = pre_ln(x, lambda h: sub(h), seed=0)
    y_post_ref = post_ln(x, lambda h: sub(h), seed=1)

    # Eval mode: dropout is identity.
    y_eval = pre_ln(x, sub, seed=0, training=False)

    jax.block_until_ready((y_pre, y_post, y_pre_ref, y_post_ref, y_eval))

    assert y_pre.shape == x.shape and y_post.shape == x.shape
    assert jnp.all(jnp.isfinite(y_pre)) and jnp.all(jnp.isfinite(y_post))
    assert jnp.all(jnp.isfinite(y_eval))
    # The index-hash dropout mask is tiling-independent, so the fused and
    # unfused paths must agree.
    assert jnp.allclose(y_pre, y_pre_ref, atol=1e-4, rtol=1e-4)
    assert jnp.allclose(y_post, y_post_ref, atol=1e-4, rtol=1e-4)
    print("KERNEL_OK")
</pallas_src>

<mosaic_0001>
module attributes {stable_mosaic.version = 11 : i64} {
  func.func @_fused_pre_ln_linear_kernel(%arg0: i32, %arg1: memref<1xi32, #tpu.memory_space<smem>>, %arg2: memref<16x128xf32, #tpu.memory_space<vmem>>, %arg3: memref<128x128xf32, #tpu.memory_space<vmem>>, %arg4: memref<1x128xf32, #tpu.memory_space<vmem>>, %arg5: memref<1x128xf32, #tpu.memory_space<vmem>>, %arg6: memref<1x128xf32, #tpu.memory_space<vmem>>, %arg7: memref<16x128xf32, #tpu.memory_space<vmem>>) attributes {dimension_semantics = [#tpu.dimension_semantics<parallel>], iteration_bounds = array<i64: 1>, scalar_prefetch = 1 : i64, scratch_operands = 0 : i64, tpu.core_type = #tpu.core_type<tc>, window_params = [{transform_indices = @transform_0, window_bounds = array<i64: 16, 128>}, {pipeline_mode = #tpu.pipeline_mode<synchronous>, transform_indices = @transform_1, window_bounds = array<i64: 128, 128>}, {pipeline_mode = #tpu.pipeline_mode<synchronous>, transform_indices = @transform_2, window_bounds = array<i64: 1, 128>}, {pipeline_mode = #tpu.pipeline_mode<synchronous>, transform_indices = @transform_3, window_bounds = array<i64: 1, 128>}, {pipeline_mode = #tpu.pipeline_mode<synchronous>, transform_indices = @transform_4, window_bounds = array<i64: 1, 128>}, {transform_indices = @transform_5, window_bounds = array<i64: 16, 128>}]} {
    %c0 = arith.constant 0 : index
    %c0_0 = arith.constant 0 : index
    %0 = vector.load %arg2[%c0, %c0_0] : memref<16x128xf32, #tpu.memory_space<vmem>>, vector<16x128xf32>
    %c0_1 = arith.constant 0 : index
    %c0_2 = arith.constant 0 : index
    %1 = vector.load %arg5[%c0_1, %c0_2] : memref<1x128xf32, #tpu.memory_space<vmem>>, vector<1x128xf32>
    %c0_3 = arith.constant 0 : index
    %c0_4 = arith.constant 0 : index
    %2 = vector.load %arg6[%c0_3, %c0_4] : memref<1x128xf32, #tpu.memory_space<vmem>>, vector<1x128xf32>
    %cst = arith.constant dense<0.000000e+00> : vector<16xf32>
    %3 = vector.multi_reduction <add>, %0, %cst [1] : vector<16x128xf32> to vector<16xf32>
    %4 = vector.shape_cast %3 : vector<16xf32> to vector<16x1xf32>
    %cst_5 = arith.constant 1.280000e+02 : f32
    %5 = vector.broadcast %cst_5 : f32 to vector<16x1xf32>
    %6 = arith.divf %4, %5 : vector<16x1xf32>
    %7 = vector.broadcast %6 : vector<16x1xf32> to vector<16x128xf32>
    %8 = arith.subf %0, %7 : vector<16x128xf32>
    %9 = arith.mulf %8, %8 : vector<16x128xf32>
    %cst_6 = arith.constant dense<0.000000e+00> : vector<16xf32>
    %10 = vector.multi_reduction <add>, %9, %cst_6 [1] : vector<16x128xf32> to vector<16xf32>
    %11 = vector.shape_cast %10 : vector<16xf32> to vector<16x1xf32>
    %cst_7 = arith.constant 1.280000e+02 : f32
    %12 = vector.broadcast %cst_7 : f32 to vector<16x1xf32>
    %13 = arith.divf %11, %12 : vector<16x1xf32>
    %14 = vector.broadcast %6 : vector<16x1xf32> to vector<16x128xf32>
    %15 = arith.subf %0, %14 : vector<16x128xf32>
    %cst_8 = arith.constant 9.99999974E-6 : f32
    %16 = vector.broadcast %cst_8 : f32 to vector<16x1xf32>
    %17 = arith.addf %13, %16 : vector<16x1xf32>
    %18 = math.rsqrt %17 : vector<16x1xf32>
    %19 = vector.broadcast %18 : vector<16x1xf32> to vector<16x128xf32>
    %20 = arith.mulf %15, %19 : vector<16x128xf32>
    %21 = vector.broadcast %1 : vector<1x128xf32> to vector<16x128xf32>
    %22 = arith.mulf %20, %21 : vector<16x128xf32>
    %23 = vector.broadcast %2 : vector<1x128xf32> to vector<16x128xf32>
    %24 = arith.addf %22, %23 : vector<16x128xf32>
    %c0_9 = arith.constant 0 : index
    %c0_10 = arith.constant 0 : index
    %25 = vector.load %arg3[%c0_9, %c0_10] : memref<128x128xf32, #tpu.memory_space<vmem>>, vector<128x128xf32>
    %cst_11 = arith.constant dense<0.000000e+00> : vector<16x128xf32>
    %26 = tpu.matmul %24, %25, %cst_11 {dimension_numbers = #tpu.dot_dimension_numbers<[1], [0], [0], [1], [0, 0, 1, 1], [], []>} : vector<16x128xf32>, vector<128x128xf32>, vector<16x128xf32> -> vector<16x128xf32>
    %c0_12 = arith.constant 0 : index
    %c0_13 = arith.constant 0 : index
    %27 = vector.load %arg4[%c0_12, %c0_13] : memref<1x128xf32, #tpu.memory_space<vmem>>, vector<1x128xf32>
    %28 = vector.broadcast %27 : vector<1x128xf32> to vector<16x128xf32>
    %29 = arith.addf %26, %28 : vector<16x128xf32>
    %c16_i32 = arith.constant 16 : i32
    %30 = arith.muli %arg0, %c16_i32 : i32
    %c0_14 = arith.constant 0 : index
    %31 = memref.load %arg1[%c0_14] : memref<1xi32, #tpu.memory_space<smem>>
    %32 = tpu.iota {dimensions = array<i32: 0>} : vector<16x128xi32>
    %33 = vector.broadcast %30 : i32 to vector<16x128xi32>
    %34 = arith.addi %32, %33 : vector<16x128xi32>
    %35 = tpu.iota {dimensions = array<i32: 1>} : vector<16x128xi32>
    %c128_i32 = arith.constant 128 : i32
    %36 = vector.broadcast %c128_i32 : i32 to vector<16x128xi32>
    %37 = arith.muli %34, %36 : vector<16x128xi32>
    %38 = arith.addi %37, %35 : vector<16x128xi32>
    %39 = vector.broadcast %31 : i32 to vector<16x128xi32>
    %40 = arith.xori %38, %39 : vector<16x128xi32>
    %c16_i32_15 = arith.constant 16 : i32
    %41 = vector.broadcast %c16_i32_15 : i32 to vector<16x128xi32>
    %42 = arith.shrui %40, %41 : vector<16x128xi32>
    %43 = arith.xori %40, %42 : vector<16x128xi32>
    %c2146121005_i32 = arith.constant 2146121005 : i32
    %44 = vector.broadcast %c2146121005_i32 : i32 to vector<16x128xi32>
    %45 = arith.muli %43, %44 : vector<16x128xi32>
    %c15_i32 = arith.constant 15 : i32
    %46 = vector.broadcast %c15_i32 : i32 to vector<16x128xi32>
    %47 = arith.shrui %45, %46 : vector<16x128xi32>
    %48 = arith.xori %45, %47 : vector<16x128xi32>
    %c-2073254261_i32 = arith.constant -2073254261 : i32
    %49 = vector.broadcast %c-2073254261_i32 : i32 to vector<16x128xi32>
    %50 = arith.muli %48, %49 : vector<16x128xi32>
    %c16_i32_16 = arith.constant 16 : i32
    %51 = vector.broadcast %c16_i32_16 : i32 to vector<16x128xi32>
    %52 = arith.shrui %50, %51 : vector<16x128xi32>
    %53 = arith.xori %50, %52 : vector<16x128xi32>
    %c8_i32 = arith.constant 8 : i32
    %54 = vector.broadcast %c8_i32 : i32 to vector<16x128xi32>
    %55 = arith.shrui %53, %54 : vector<16x128xi32>
    %56 = arith.uitofp %55 : vector<16x128xi32> to vector<16x128xf32>
    %cst_17 = arith.constant 5.96046448E-8 : f32
    %57 = vector.broadcast %cst_17 : f32 to vector<16x128xf32>
    %58 = arith.mulf %56, %57 : vector<16x128xf32>
    %cst_18 = arith.constant 0.899999976 : f32
    %59 = vector.broadcast %cst_18 : f32 to vector<16x128xf32>
    %60 = arith.cmpf olt, %58, %59 : vector<16x128xf32>
    %cst_19 = arith.constant 1.11111116 : f32
    %cst_20 = arith.constant 0.000000e+00 : f32
    %61 = vector.broadcast %cst_19 : f32 to vector<16x128xf32>
    %62 = vector.broadcast %cst_20 : f32 to vector<16x128xf32>
    %63 = arith.select %60, %61, %62 : vector<16x128xi1>, vector<16x128xf32>
    %64 = arith.mulf %29, %63 : vector<16x128xf32>
    %65 = arith.addf %0, %64 : vector<16x128xf32>
    %c0_21 = arith.constant 0 : index
    %c0_22 = arith.constant 0 : index
    %66 = vector.load %arg7[%c0_21, %c0_22] : memref<16x128xf32, #tpu.memory_space<vmem>>, vector<16x128xf32>
    tpu.vector_store %arg7[%c0_21, %c0_22], %65 {strides = array<i32>} : memref<16x128xf32, #tpu.memory_space<vmem>>, vector<16x128xf32>,
    return
  }
  func.func @transform_0(%arg0: i32, %arg1: memref<1xi32, #tpu.memory_space<smem>>) -> (i32, i32) {
    %c0_i32 = arith.constant 0 : i32
    %c0_i32_0 = arith.constant 0 : i32
    return %arg0, %c0_i32 : i32, i32
  }
  func.func @transform_1(%arg0: i32, %arg1: memref<1xi32, #tpu.memory_space<smem>>) -> (i32, i32) {
    %c0_i32 = arith.constant 0 : i32
    %c0_i32_0 = arith.constant 0 : i32
    %c0_i32_1 = arith.constant 0 : i32
    return %c0_i32, %c0_i32_0 : i32, i32
  }
  func.func @transform_2(%arg0: i32, %arg1: memref<1xi32, #tpu.memory_space<smem>>) -> (i32, i32) {
    %c0_i32 = arith.constant 0 : i32
    %c0_i32_0 = arith.constant 0 : i32
    %c0_i32_1 = arith.constant 0 : i32
    return %c0_i32, %c0_i32_0 : i32, i32
  }
  func.func @transform_3(%arg0: i32, %arg1: memref<1xi32, #tpu.memory_space<smem>>) -> (i32, i32) {
    %c0_i32 = arith.constant 0 : i32
    %c0_i32_0 = arith.constant 0 : i32
    %c0_i32_1 = arith.constant 0 : i32
    return %c0_i32, %c0_i32_0 : i32, i32
  }
  func.func @transform_4(%arg0: i32, %arg1: memref<1xi32, #tpu.memory_space<smem>>) -> (i32, i32) {
    %c0_i32 = arith.constant 0 : i32
    %c0_i32_0 = arith.constant 0 : i32
    %c0_i32_1 = arith.constant 0 : i32
    return %c0_i32, %c0_i32_0 : i32, i32
  }
  func.func @transform_5(%arg0: i32, %arg1: memref<1xi32, #tpu.memory_space<smem>>) -> (i32, i32) {
    %c0_i32 = arith.constant 0 : i32
    %c0_i32_0 = arith.constant 0 : i32
    return %arg0, %c0_i32 : i32, i32
  }
}

</mosaic_0001>

<llo_original>
// kernel: tpu_custom_call.1
$region0: #{tpu_custom_call.1}
  #allocation0 [shape = 'u32[]', space=smem, size = 0x4, offset = 0x4, fixed_abs, tag = 'smem constant byte address 0x4 - core index']
  #allocation1 [shape = 'u32[144,128]{1,0:T(1,128)}', space=vmem, size = 0x12000, scoped, tag = 'internal scratch']
  #allocation2 [shape = 's32[1]{0}', space=sflag, size = 0x4, scoped, tag = 'scoped memory for tpu_custom_call.1']
  #allocation3 [shape = 's32[1]{0:T(128)S(6)}', space=smem, size = 0x200, scoped, tag = 'prefetched SMEM operand 0']
  %s0 = inlined_call_operand.<no memory space> [shape: s32[1], index: 0, kind: input, shape index: {}]
  %s1 = inlined_call_operand.hbm [shape: f32[16,128], index: 1, kind: input, shape index: {}]
  %s2 = inlined_call_operand.hbm [shape: f32[128,128], index: 2, kind: input, shape index: {}]
  %s3 = inlined_call_operand.vmem [shape: f32[1,128], index: 3, kind: input, shape index: {}]
  %s4 = inlined_call_operand.vmem [shape: f32[1,128], index: 4, kind: input, shape index: {}]
  %s5 = inlined_call_operand.vmem [shape: f32[1,128], index: 5, kind: input, shape index: {}]
  %s6 = inlined_call_operand.hbm [shape: f32[16,128], index: 6, kind: output, shape index: {}]
  %s7 = sld [smem:[#allocation0]]
  $region38: #{tpu_custom_call.1} parent=0
    _
  %s9 = ssub.s32 1, %s7
  %s10 = scalar_select 0, %s9, %s7
  %11 = sst [smem:[#allocation3]] %s0
  $region1: #{tpu_custom_call.1} parent=0
    #allocation4 [shape = 'u8[8192]{0}', space=vmem, size = 0x2000, scoped, tag = 'input window, operand 1, single buffered']
    #allocation5 [shape = 's32[1]{0}', space=sflag, size = 0x4, scoped, tag = 'scoped memory for tpu_custom_call.1']
    #allocation6 [shape = 's32[1]{0}', space=sflag, size = 0x4, scoped, tag = 'scoped memory for tpu_custom_call.1']
    #allocation7 [shape = 'u8[65536]{0}', space=vmem, size = 0x10000, scoped, tag = 'input window, operand 2, single buffered']
    #allocation8 [shape = 's32[1]{0}', space=sflag, size = 0x4, scoped, tag = 'scoped memory for tpu_custom_call.1']
    #allocation9 [shape = 'u8[8192]{0}', space=vmem, size = 0x2000, scoped, tag = 'output window, operand 0, single buffered']
    %12 = vsyncpa [#allocation5], 0
    %13 = vsyncpa [#allocation8], 0
    %14 = vsyncpa [#allocation6], 0
    // Predicated region
    $region2: #{tpu_custom_call.1} parent=1 // pred_check
      _
    $region3: #{tpu_custom_call.1} parent=1 // pred_check_branch
      %16 = sbr.rel (0) target = $region5
    $region4: #{tpu_custom_call.1} parent=1 // pred_region
      %s18 = ssub.s32 256, 256
      %19 = vsyncadd [#allocation5], %s18
      %s20 = sshll.u32 [#allocation4], 4
      %s21 = int_to_ptr.vmem [resolvable:$true] %s20
      %26 = dma.hbm_to_vmem [thread:$0]  %s1, 256, %s21, [#allocation5], 128, 128, 8
    $region5: #{tpu_custom_call.1} parent=1 // pred_fallthru
      _
    // Predicated region
    $region6: #{tpu_custom_call.1} parent=1 // pred_check
      _
    $region7: #{tpu_custom_call.1} parent=1 // pred_check_branch
      %28 = sbr.rel (0) target = $region9
    $region8: #{tpu_custom_call.1} parent=1 // pred_region
      %s30 = ssub.s32 2048, 2048
      %31 = vsyncadd [#allocation8], %s30
      %s32 = sshll.u32 [#allocation7], 4
      %s33 = int_to_ptr.vmem [resolvable:$true] %s32
      %38 = dma.hbm_to_vmem [thread:$0]  %s2, 2048, %s33, [#allocation8], 128, 128, 8
    $region9: #{tpu_custom_call.1} parent=1 // pred_fallthru
      _
    // Predicated region
    $region10: #{tpu_custom_call.1} parent=1 // pred_check
      _
    $region11: #{tpu_custom_call.1} parent=1 // pred_check_branch
      %40 = sbr.rel (0) target = $region13
    $region12: #{tpu_custom_call.1} parent=1 // pred_region
      _
    $region13: #{tpu_custom_call.1} parent=1 // pred_fallthru
      _
    // Predicated region
    $region14: #{tpu_custom_call.1} parent=1 // pred_check
      _
    $region15: #{tpu_custom_call.1} parent=1 // pred_check_branch
      %42 = sbr.rel (0) target = $region17
    $region16: #{tpu_custom_call.1} parent=1 // pred_region
      _
    $region17: #{tpu_custom_call.1} parent=1 // pred_fallthru
      _
    // Predicated region
    $region18: #{tpu_custom_call.1} parent=1 // pred_check
      _
    $region19: #{tpu_custom_call.1} parent=1 // pred_check_branch
      %44 = sbr.rel (0) target = $region21
    $region20: #{tpu_custom_call.1} parent=1 // pred_region
      _
    $region21: #{tpu_custom_call.1} parent=1 // pred_fallthru
      _
    // Predicated region
    $region22: #{tpu_custom_call.1} parent=1 // pred_check
      _
    $region23: #{tpu_custom_call.1} parent=1 // pred_check_branch
      %46 = sbr.rel (0) target = $region25
    $region24: #{tpu_custom_call.1} parent=1 // pred_region
      %47 = dma.done [#allocation5], 256
    $region25: #{tpu_custom_call.1} parent=1 // pred_fallthru
      _
    // Predicated region
    $region26: #{tpu_custom_call.1} parent=1 // pred_check
      _
    $region27: #{tpu_custom_call.1} parent=1 // pred_check_branch
      %49 = sbr.rel (0) target = $region29
    $region28: #{tpu_custom_call.1} parent=1 // pred_region
      %50 = dma.done [#allocation8], 2048
    $region29: #{tpu_custom_call.1} parent=1 // pred_fallthru
      _
    %v51 = vld [vmem:[#allocation4] sm:$0xff]
    %v52 = vld [vmem:[#allocation4 + $0x8] sm:$0xff]
    %v53 = vld [vmem:[%s4] sm:$0x1]
    %v54 = vld [vmem:[%s5] sm:$0x1]
    %55 = vadd.xlane.f32.xlu0 %v51
    %v56 = vpop.xlane.xlu0 %55
    %57 = vadd.xlane.f32.xlu0 %v52
    %v58 = vpop.xlane.xlu0 %57
    %v59 = vrcp.pop 128.0
    %v60 = vmul.f32 %v56, %v59
    %v61 = vmul.f32 %v58, %v59
    %v62 = vsub.f32 %v51, %v60
    %v63 = vsub.f32 %v52, %v61
    %v64 = vmul.f32 %v62, %v62
    %v65 = vmul.f32 %v63, %v63
    %66 = vadd.xlane.f32.xlu0 %v64
    %v67 = vpop.xlane.xlu0 %66
    %68 = vadd.xlane.f32.xlu0 %v65
    %v69 = vpop.xlane.xlu0 %68
    %v70 = vmul.f32 %v67, %v59
    %v71 = vmul.f32 %v69, %v59
    %v72 = vadd.f32 %v70, 1e-05
    %v73 = vadd.f32 %v71, 1e-05
    %v74 = vrsqrt.pop %v72
    %v75 = vrsqrt.pop %v73
    %v76 = vmul.f32 %v62, %v74
    %v77 = vmul.f32 %v63, %v75
    %v79 = vlaneseq
    %v80 = vshrl.u32 %v79, 7
    %v81 = vsub.s32 0, %v80
    %v82 = vrot.slane %v53, %v81
    %v84 = vmul.f32 %v76, %v82
    %v85 = vmul.f32 %v77, %v82
    %v87 = vlaneseq
    %v88 = vshrl.u32 %v87, 7
    %v89 = vsub.s32 0, %v88
    %v90 = vrot.slane %v54, %v89
    %v92 = vadd.f32 %v84, %v90
    %v93 = vadd.f32 %v85, %v90
    %v94 = vld [vmem:[#allocation7] sm:$0xff]
    %v95 = vld [vmem:[#allocation7 + $0x8] sm:$0xff]
    %v96 = vld [vmem:[#allocation7 + $0x10] sm:$0xff]
    %v97 = vld [vmem:[#allocation7 + $0x18] sm:$0xff]
    %v98 = vld [vmem:[#allocation7 + $0x20] sm:$0xff]
    %v99 = vld [vmem:[#allocation7 + $0x28] sm:$0xff]
    %v100 = vld [vmem:[#allocation7 + $0x30] sm:$0xff]
    %v101 = vld [vmem:[#allocation7 + $0x38] sm:$0xff]
    %v102 = vld [vmem:[#allocation7 + $0x40] sm:$0xff]
    %v103 = vld [vmem:[#allocation7 + $0x48] sm:$0xff]
    %v104 = vld [vmem:[#allocation7 + $0x50] sm:$0xff]
    %v105 = vld [vmem:[#allocation7 + $0x58] sm:$0xff]
    %v106 = vld [vmem:[#allocation7 + $0x60] sm:$0xff]
    %v107 = vld [vmem:[#allocation7 + $0x68] sm:$0xff]
    %v108 = vld [vmem:[#allocation7 + $0x70] sm:$0xff]
    %v109 = vld [vmem:[#allocation7 + $0x78] sm:$0xff]
    %v110 = vld [vmem:[%s3] sm:$0x1]
    %v112 = vlaneseq
    %v113 = vshrl.u32 %v112, 7
    %v114 = vsub.s32 0, %v113
    %v115 = vrot.slane %v110, %v114
    %117 = vmatprep.subr.mxu0 0.0
    %118 = vmatpush1.msra.mxu0 %v94
    %119 = vmatprep.subr.mxu0 0.0
    %120 = vmatpush1.msra.mxu0 %v95
    %121 = vmatprep.subr.mxu0 0.0
    %122 = vmatpush1.msra.mxu0 %v96
    %123 = vmatprep.subr.mxu0 0.0
    %124 = vmatpush1.msra.mxu0 %v97
    %125 = vmatprep.subr.mxu0 0.0
    %126 = vmatpush1.msra.mxu0 %v98
    %127 = vmatprep.subr.mxu0 0.0
    %128 = vmatpush1.msra.mxu0 %v99
    %129 = vmatprep.subr.mxu0 0.0
    %130 = vmatpush1.msra.mxu0 %v100
    %131 = vmatprep.subr.mxu0 0.0
    %132 = vmatpush1.msra.mxu0 %v101
    %133 = vmatprep.subr.mxu0 0.0
    %134 = vmatpush1.msra.mxu0 %v102
    %135 = vmatprep.subr.mxu0 0.0
    %136 = vmatpush1.msra.mxu0 %v103
    %137 = vmatprep.subr.mxu0 0.0
    %138 = vmatpush1.msra.mxu0 %v104
    %139 = vmatprep.subr.mxu0 0.0
    %140 = vmatpush1.msra.mxu0 %v105
    %141 = vmatprep.subr.mxu0 0.0
    %142 = vmatpush1.msra.mxu0 %v106
    %143 = vmatprep.subr.mxu0 0.0
    %144 = vmatpush1.msra.mxu0 %v107
    %145 = vmatprep.subr.mxu0 0.0
    %146 = vmatpush1.msra.mxu0 %v108
    %147 = vmatprep.subr.mxu0 0.0
    %148 = vmatpush1.msra.mxu0 %v109
    %149 = vmatprep.subr.mxu0 0.0
    %150 = vmatpush1.msra.mxu0 0.0
    %151 = vmatprep.subr.mxu0 0.0
    %152 = vmatpush1.msra.mxu0 0.0
    %153 = vmatprep.subr.mxu0 0.0
    %154 = vmatpush1.msra.mxu0 0.0
    %155 = vmatprep.subr.mxu0 0.0
    %156 = vmatpush1.msra.mxu0 0.0
    %157 = vmatprep.subr.mxu0 0.0
    %158 = vmatpush1.msra.mxu0 0.0
    %159 = vmatprep.subr.mxu0 0.0
    %160 = vmatpush1.msra.mxu0 0.0
    %161 = vmatprep.subr.mxu0 0.0
    %162 = vmatpush1.msra.mxu0 0.0
    %163 = vmatprep.subr.mxu0 0.0
    %164 = vmatpush1.msra.mxu0 0.0
    %165 = vmatprep.subr.mxu0 0.0
    %166 = vmatpush1.msra.mxu0 0.0
    %167 = vmatprep.subr.mxu0 0.0
    %168 = vmatpush1.msra.mxu0 0.0
    %169 = vmatprep.subr.mxu0 0.0
    %170 = vmatpush1.msra.mxu0 0.0
    %171 = vmatprep.subr.mxu0 0.0
    %172 = vmatpush1.msra.mxu0 0.0
    %173 = vmatprep.subr.mxu0 0.0
    %174 = vmatpush1.msra.mxu0 0.0
    %175 = vmatprep.subr.mxu0 0.0
    %176 = vmatpush1.msra.mxu0 0.0
    %177 = vmatprep.subr.mxu0 0.0
    %178 = vmatpush1.msra.mxu0 0.0
    %179 = vmatprep.subr.mxu0 0.0
    %180 = vmatpush1.msra.mxu0 0.0
    %181 = vmatprep.mubr.f32.mxu0 0.0
    %182 = vmatmul.mubr.f32.gmra.mrb[0].mxu0 %v92
    %v183 = vpop.f32.mrb[0].mxu0
    %v184 = vadd.f32 %v115, %v183
    %v185 = vpop.f32.mrb[0].mxu0
    %186 = vmatprep.mubr.f32.mxu0 0.0
    %187 = vmatmul.mubr.f32.gmra.mrb[0].mxu0 %v93
    %v188 = vpop.f32.mrb[0].mxu0
    %v189 = vadd.f32 %v115, %v188
    %v190 = vpop.f32.mrb[0].mxu0
    %191 = vdwg.mxu0
    %s192 = smul.u32 0, 16
    %s193 = sld [smem:[#allocation3]]
    %v194 = vlaneseq
    %v195 = vshrl.u32 %v194, 7
    %v196 = vadd.s32 %v195, 8
    %v197 = vstv %s192
    %v198 = vadd.s32 %v195, %v197
    %v199 = vadd.s32 %v196, %v197
    %v200 = vlaneseq
    %v201 = vand.u32 %v200, 127
    %v202 = vmul.u32 %v198, 128
    %v203 = vmul.u32 %v199, 128
    %v204 = vadd.s32 %v202, %v201
    %v205 = vadd.s32 %v203, %v201
    %v206 = vstv %s193
    %v207 = vxor.u32 %v204, %v206
    %v208 = vxor.u32 %v205, %v206
    %v209 = vshrl.u32 %v207, 16
    %v210 = vshrl.u32 %v208, 16
    %v211 = vxor.u32 %v207, %v209
    %v212 = vxor.u32 %v208, %v210
    %v213 = vmul.u32 %v211, 2146121005
    %v214 = vmul.u32 %v212, 2146121005
    %v215 = vshrl.u32 %v213, 15
    %v216 = vshrl.u32 %v214, 15
    %v217 = vxor.u32 %v213, %v215
    %v218 = vxor.u32 %v214, %v216
    %v219 = vmul.u32 %v217, 2221713035
    %v220 = vmul.u32 %v218, 2221713035
    %v221 = vshrl.u32 %v219, 16
    %v222 = vshrl.u32 %v220, 16
    %v223 = vxor.u32 %v219, %v221
    %v224 = vxor.u32 %v220, %v222
    %v225 = vshrl.u32 %v223, 8
    %v226 = vshrl.u32 %v224, 8
    %v227 = vshrl.u32 %v225, 16
    %v228 = vand.u32 %v225, 65535
    %v229 = vcvt.s32.f32 %v227
    %v230 = vmul.f32 %v229, 65536.0
    %v231 = vcvt.s32.f32 %v228
    %v232 = vadd.f32 %v230, %v231
    %v233 = vshrl.u32 %v226, 16
    %v234 = vand.u32 %v226, 65535
    %v235 = vcvt.s32.f32 %v233
    %v236 = vmul.f32 %v235, 65536.0
    %v237 = vcvt.s32.f32 %v234
    %v238 = vadd.f32 %v236, %v237
    %v239 = vmul.f32 %v232, 5.9604645e-08
    %v240 = vmul.f32 %v238, 5.9604645e-08
    %vm241 = vcmp.lt.f32.partialorder %v239, 0.9
    %vm242 = vcmp.lt.f32.partialorder %v240, 0.9
    %v243 = vsel %vm241, 1.1111112, 0.0
    %v244 = vsel %vm242, 1.1111112, 0.0
    %v245 = vmul.f32 %v184, %v243
    %v246 = vmul.f32 %v189, %v244
    %v247 = vadd.f32 %v51, %v245
    %v248 = vadd.f32 %v52, %v246
    %249 = vst [vmem:[#allocation9] sm:$0xff] %v247
    %250 = vst [vmem:[#allocation9 + $0x8] sm:$0xff] %v248
    // Predicated region
    $region30: #{tpu_custom_call.1} parent=1 // pred_check
      _
    $region31: #{tpu_custom_call.1} parent=1 // pred_check_branch
      %252 = sbr.rel (0) target = $region33
    $region32: #{tpu_custom_call.1} parent=1 // pred_region
      %s254 = ssub.s32 256, 256
      %255 = vsyncadd [#allocation6], %s254
      %s256 = sshll.u32 [#allocation9], 4
      %s257 = int_to_ptr.vmem [resolvable:$true] %s256
      %262 = dma.vmem_to_hbm [thread:$0]  %s257, 256, %s6, [#allocation6], 128, 128, 8
    $region33: #{tpu_custom_call.1} parent=1 // pred_fallthru
      _
    // Predicated region
    $region34: #{tpu_custom_call.1} parent=1 // pred_check
      _
    $region35: #{tpu_custom_call.1} parent=1 // pred_check_branch
      %264 = sbr.rel (0) target = $region37
    $region36: #{tpu_custom_call.1} parent=1 // pred_region
      %265 = dma.done [#allocation6], 256
    $region37: #{tpu_custom_call.1} parent=1 // pred_fallthru
      _
    %266 = vsyncpa [#allocation5], 1
    %267 = vsyncpa [#allocation8], 1
    %268 = vsyncpa [#allocation6], 1

</llo_original>
